<compile_context>
chip_gen: v7x
topology: tpu7x:2x2x1
jax: 0.10.0
libtpu: 0.0.40
codegen_flags: <defaults>
</compile_context>

<pallas_src>
import functools
from typing import NamedTuple

import jax
import jax.numpy as jnp
from jax.experimental import pallas as pl
from jax.experimental.pallas import tpu as pltpu


def _round_up(x, m):
    return (x + m - 1) // m * m


def _cdiv(a, b):
    return (a + b - 1) // b


def _block_spec(shape, index_map, *, buffers=None):
    """BlockSpec with optional explicit buffer depth (falls back to default)."""
    if buffers is not None and hasattr(pl, "Buffered"):
        try:
            return pl.BlockSpec(shape, index_map, pipeline_mode=pl.Buffered(buffers))
        except TypeError:
            pass
    return pl.BlockSpec(shape, index_map)


# ----------------------------------------------------------------------------
# Hardware detection (generation-aware VMEM budget / MXU alignment / #cores).
# ----------------------------------------------------------------------------
class _HwInfo(NamedTuple):
    vmem_bytes: int   # per-TensorCore VMEM
    align: int        # feature-dim alignment: 256 (v6e/v7x 2x256^2 MXU) or 128
    cores: int        # TensorCores sharing the parallel grid axis (2 on v7x)


@functools.lru_cache(maxsize=1)
def _hw_info() -> _HwInfo:
    kind = ""
    try:
        kind = jax.devices()[0].device_kind.lower()
    except Exception:
        pass
    is_v7 = ("v7" in kind) or ("7x" in kind)
    is_v6 = "v6" in kind
    cores = 2 if is_v7 else 1
    align = 256 if (is_v6 or is_v7) else 128

    if is_v7 or not kind:
        vmem = 64 << 20            # v7x per-core / conservative unknown default
    elif ("v2" in kind) or ("v3" in kind):
        vmem = 16 << 20
    else:
        vmem = 128 << 20           # v4 / v5e / v6e
    try:
        vmem = int(getattr(pltpu.get_tpu_info(), "vmem_capacity_bytes", vmem))
    except Exception:
        pass
    if is_v7:
        vmem = min(vmem, 64 << 20)     # per-core budget, never the 2-core total
    vmem = min(vmem, 128 << 20)
    return _HwInfo(vmem_bytes=vmem, align=align, cores=cores)


# ----------------------------------------------------------------------------
# One-time parameter preparation (hoisted out of the forward path).
# ----------------------------------------------------------------------------
class GatedMLPParams(NamedTuple):
    d_model: int
    d_pad: int
    wg: jax.Array      # (Dp, Dp) compute dtype
    wv: jax.Array      # (Dp, Dp) compute dtype
    wout: jax.Array    # (Dp, Dp) compute dtype
    bg: jax.Array      # (1, Dp) f32
    bv: jax.Array      # (1, Dp) f32
    bout: jax.Array    # (1, Dp) f32


def prepare_gated_mlp_params(wfc_t, bfc, wout_t, bout, *,
                             compute_dtype=jnp.bfloat16, align=None):
    """Split / pad / cast the weights ONCE; reuse the result across forward calls."""
    D = wout_t.shape[0]
    if align is None:
        align = _hw_info().align
    Dp = _round_up(D, align)
    pad = Dp - D

    wg = wfc_t[:, :D]          # gate half first (matches torch .chunk(2, dim=-1))
    wv = wfc_t[:, D:]
    bg, bv = bfc[:D], bfc[D:]
    if pad:
        wg = jnp.pad(wg, ((0, pad), (0, pad)))
        wv = jnp.pad(wv, ((0, pad), (0, pad)))
        wout_t = jnp.pad(wout_t, ((0, pad), (0, pad)))
        bg = jnp.pad(bg, (0, pad))
        bv = jnp.pad(bv, (0, pad))
        bout = jnp.pad(bout, (0, pad))

    return GatedMLPParams(
        d_model=D, d_pad=Dp,
        wg=wg.astype(compute_dtype),
        wv=wv.astype(compute_dtype),
        wout=wout_t.astype(compute_dtype),
        bg=bg.reshape(1, Dp).astype(jnp.float32),
        bv=bv.reshape(1, Dp).astype(jnp.float32),
        bout=bout.reshape(1, Dp).astype(jnp.float32),
    )


# ----------------------------------------------------------------------------
# Kernels.
# ----------------------------------------------------------------------------
def _gated_mlp_resident_kernel(x_ref, wg_ref, wv_ref, bg_ref, bv_ref,
                               wout_ref, bout_ref, o_ref):
    """All three weights resident in VMEM; grid tiles rows only."""
    x = x_ref[...]                                                      # (tm, Dp)
    gate = jnp.dot(x, wg_ref[...], preferred_element_type=jnp.float32) + bg_ref[...]
    val = jnp.dot(x, wv_ref[...], preferred_element_type=jnp.float32) + bv_ref[...]
    y = jax.nn.sigmoid(gate) * val                                      # f32 gating
    out = jnp.dot(y.astype(wout_ref.dtype), wout_ref[...],
                  preferred_element_type=jnp.float32) + bout_ref[...]
    o_ref[...] = out.astype(o_ref.dtype)


def _gated_mlp_ktiled_kernel(x_ref, wg_ref, wv_ref, bg_ref, bv_ref,
                             wout_ref, bout_ref, o_ref, acc_ref):
    """Hidden-dim tiled path: column block of W_gate/W_val + matching row block of
    W_out per step, accumulating into an f32 VMEM accumulator (P3 pattern)."""
    k = pl.program_id(1)

    @pl.when(k == 0)
    def _():
        acc_ref[...] = jnp.zeros_like(acc_ref)

    x = x_ref[...]                                                      # (tm, Dp)
    gate = jnp.dot(x, wg_ref[...], preferred_element_type=jnp.float32) + bg_ref[...]
    val = jnp.dot(x, wv_ref[...], preferred_element_type=jnp.float32) + bv_ref[...]
    y = jax.nn.sigmoid(gate) * val                                      # (tm, tk) f32
    acc_ref[...] += jnp.dot(y.astype(wout_ref.dtype), wout_ref[...],
                            preferred_element_type=jnp.float32)

    @pl.when(k == pl.num_programs(1) - 1)
    def _():
        o_ref[...] = (acc_ref[...] + bout_ref[...]).astype(o_ref.dtype)


# ----------------------------------------------------------------------------
# VMEM estimates & tiling heuristics.
# ----------------------------------------------------------------------------
def _resident_vmem_bytes(tm, Dp, c_sz, o_sz):
    weights = 3 * Dp * Dp * c_sz                 # single-buffered resident weights
    biases = 3 * Dp * 4
    io = 2 * tm * Dp * (c_sz + o_sz)             # double-buffered x / out tiles
    inter = 4 * tm * Dp * 4                      # gate/val/y/out f32 live tiles
    return weights + biases + io + inter


def _ktiled_vmem_bytes(tm, Dp, tk, c_sz, o_sz):
    weights = 2 * 3 * Dp * tk * c_sz             # double-buffered weight slices
    biases = 2 * 2 * tk * 4 + Dp * 4
    io = 2 * tm * Dp * (c_sz + o_sz)
    acc = tm * Dp * 4
    inter = 3 * tm * tk * 4 + tm * Dp * 4
    return weights + biases + io + acc + inter


def _pick_tm(M, tm_target, cores, row_pack):
    """~256-row tiles; >= 2 steps per TensorCore when M allows; never tm=8 slivers."""
    tm_target = max(row_pack, _round_up(tm_target, row_pack))
    if M <= tm_target:
        return _round_up(max(M, 1), row_pack)
    min_steps = 2 * cores
    tm = min(tm_target, _round_up(_cdiv(M, min_steps), row_pack))
    if M >= 128:
        tm = max(tm, 128)
    return _round_up(tm, row_pack)


# ----------------------------------------------------------------------------
# Forward wrapper.
# ----------------------------------------------------------------------------
def gated_mlp(x, params: GatedMLPParams, *, tm=256,
              force_hidden_tiling=False, tk=None):
    """x: (B, S, D) -> (B, S, D); matches torch GatedMLP.forward semantics."""
    B, S, D = x.shape
    assert D == params.d_model
    M = B * S
    Dp = params.d_pad
    out_dtype = x.dtype
    compute_dtype = params.wg.dtype
    c_sz = jnp.dtype(compute_dtype).itemsize
    o_sz = jnp.dtype(out_dtype).itemsize

    hw = _hw_info()
    budget = max(int(0.8 * hw.vmem_bytes), 16 << 20)
    vmem_limit = int(min(budget, 112 << 20))

    row_pack = 16 if c_sz < 4 else 8                     # bf16 sublane packing
    tm_eff = _pick_tm(M, tm, hw.cores, row_pack)

    # Path selection: keep all weights resident when they fit the per-core budget,
    # otherwise tile the hidden dim (v7x large-D escape hatch).
    use_ktiled = force_hidden_tiling or (
        _resident_vmem_bytes(tm_eff, Dp, c_sz, o_sz) > budget)

    if use_ktiled:
        if tk is None:
            tk = min(Dp, 512)
            while tk > 128 and (Dp % tk or
                                _ktiled_vmem_bytes(tm_eff, Dp, tk, c_sz, o_sz) > budget):
                tk //= 2
        tk = max(128, min(int(tk), Dp))
        assert Dp % tk == 0, "hidden tile must divide the padded feature dim"
        while (tm_eff > 2 * row_pack and
               _ktiled_vmem_bytes(tm_eff, Dp, tk, c_sz, o_sz) > budget):
            tm_eff = _round_up(tm_eff // 2, row_pack)

    Mp = _round_up(M, tm_eff)

    # x prep: cast only if needed, pad only if needed (no per-call weight work).
    x2d = x.reshape(M, D)
    if x2d.dtype != compute_dtype:
        x2d = x2d.astype(compute_dtype)
    if Mp != M or Dp != D:
        x2d = jnp.pad(x2d, ((0, Mp - M), (0, Dp - D)))

    cost = pl.CostEstimate(
        flops=6 * Mp * Dp * Dp,                  # 2*M*Dp*2Dp (fc) + 2*M*Dp*Dp (out)
        transcendentals=Mp * Dp,                 # sigmoid
        bytes_accessed=(Mp * Dp * (c_sz + o_sz) + 3 * Dp * Dp * c_sz + 3 * Dp * 4),
    )

    if not use_ktiled:
        out2d = pl.pallas_call(
            _gated_mlp_resident_kernel,
            out_shape=jax.ShapeDtypeStruct((Mp, Dp), out_dtype),
            grid_spec=pltpu.PrefetchScalarGridSpec(
                num_scalar_prefetch=0,
                grid=(Mp // tm_eff,),
                in_specs=[
                    pl.BlockSpec((tm_eff, Dp), lambda i: (i, 0)),          # x (pipelined)
                    _block_spec((Dp, Dp), lambda i: (0, 0), buffers=1),    # W_gate (resident)
                    _block_spec((Dp, Dp), lambda i: (0, 0), buffers=1),    # W_val  (resident)
                    _block_spec((1, Dp), lambda i: (0, 0), buffers=1),     # b_gate
                    _block_spec((1, Dp), lambda i: (0, 0), buffers=1),     # b_val
                    _block_spec((Dp, Dp), lambda i: (0, 0), buffers=1),    # W_out  (resident)
                    _block_spec((1, Dp), lambda i: (0, 0), buffers=1),     # b_out
                ],
                out_specs=pl.BlockSpec((tm_eff, Dp), lambda i: (i, 0)),
            ),
            compiler_params=pltpu.CompilerParams(
                dimension_semantics=("parallel",),
                vmem_limit_bytes=vmem_limit,
            ),
            cost_estimate=cost,
        )(x2d, params.wg, params.wv, params.bg, params.bv, params.wout, params.bout)
    else:
        out2d = pl.pallas_call(
            _gated_mlp_ktiled_kernel,
            out_shape=jax.ShapeDtypeStruct((Mp, Dp), out_dtype),
            grid_spec=pltpu.PrefetchScalarGridSpec(
                num_scalar_prefetch=0,
                grid=(Mp // tm_eff, Dp // tk),
                in_specs=[
                    pl.BlockSpec((tm_eff, Dp), lambda i, k: (i, 0)),       # x (k-invariant)
                    pl.BlockSpec((Dp, tk), lambda i, k: (0, k)),           # W_gate cols
                    pl.BlockSpec((Dp, tk), lambda i, k: (0, k)),           # W_val cols
                    pl.BlockSpec((1, tk), lambda i, k: (0, k)),            # b_gate slice
                    pl.BlockSpec((1, tk), lambda i, k: (0, k)),            # b_val slice
                    pl.BlockSpec((tk, Dp), lambda i, k: (k, 0)),           # W_out rows
                    _block_spec((1, Dp), lambda i, k: (0, 0), buffers=1),  # b_out (resident)
                ],
                out_specs=pl.BlockSpec((tm_eff, Dp), lambda i, k: (i, 0)),
                scratch_shapes=[pltpu.VMEM((tm_eff, Dp), jnp.float32)],    # f32 accumulator
            ),
            compiler_params=pltpu.CompilerParams(
                dimension_semantics=("parallel", "arbitrary"),
                vmem_limit_bytes=vmem_limit,
            ),
            cost_estimate=cost,
        )(x2d, params.wg, params.wv, params.bg, params.bv, params.wout, params.bout)

    return out2d[:M, :D].reshape(B, S, D)


# ----------------------------------------------------------------------------
# Pure-JAX reference (mirrors torch GatedMLP.forward).
# ----------------------------------------------------------------------------
def gated_mlp_ref(x, wfc_t, bfc, wout_t, bout):
    h = x @ wfc_t + bfc
    d = wout_t.shape[0]
    gate, val = h[..., :d], h[..., d:]
    y = jax.nn.sigmoid(gate) * val
    return y @ wout_t + bout


if __name__ == "__main__":
    B, S, D = 2, 8, 32          # batch=2, seq=8, d_model=32, expand=2
    key = jax.random.PRNGKey(0)
    kx, k1, k2, k3, k4 = jax.random.split(key, 5)

    x = jax.random.normal(kx, (B, S, D), dtype=jnp.float32)

    bound = 1.0 / (D ** 0.5)
    wfc_t = jax.random.uniform(k1, (D, 2 * D), jnp.float32, -bound, bound)  # fc.weight.T
    bfc = jax.random.uniform(k2, (2 * D,), jnp.float32, -bound, bound)
    wout_t = jax.random.uniform(k3, (D, D), jnp.float32, -bound, bound)     # out.weight.T
    bout = jax.random.uniform(k4, (D,), jnp.float32, -bound, bound)

    ref = gated_mlp_ref(x, wfc_t, bfc, wout_t, bout)

    # Default bf16 compute (MXU-native), weight-resident path: loose check.
    params_bf16 = prepare_gated_mlp_params(wfc_t, bfc, wout_t, bout)
    out_bf16 = jax.block_until_ready(gated_mlp(x, params_bf16))
    assert out_bf16.shape == (B, S, D)
    assert jnp.allclose(out_bf16, ref, atol=1e-1, rtol=1e-1), "bf16 resident mismatch"

    # Opt-in f32 compute, weight-resident path: tight check.
    params_f32 = prepare_gated_mlp_params(wfc_t, bfc, wout_t, bout,
                                          compute_dtype=jnp.float32)
    out_f32 = jax.block_until_ready(gated_mlp(x, params_f32))
    assert jnp.allclose(out_f32, ref, atol=1e-5, rtol=1e-5), "f32 resident mismatch"

    # Hidden-dim tiled fallback (large-D / v7x path), forced here for coverage.
    out_kt = jax.block_until_ready(
        gated_mlp(x, params_f32, force_hidden_tiling=True, tk=128))
    assert jnp.allclose(out_kt, ref, atol=1e-5, rtol=1e-5), "f32 hidden-tiled mismatch"

    print("KERNEL_OK")
</pallas_src>

<mosaic_0001>
module attributes {stable_mosaic.version = 11 : i64} {
  func.func @_gated_mlp_resident_kernel(%arg0: i32, %arg1: memref<16x128xbf16, #tpu.memory_space<vmem>>, %arg2: memref<128x128xbf16, #tpu.memory_space<vmem>>, %arg3: memref<128x128xbf16, #tpu.memory_space<vmem>>, %arg4: memref<1x128xf32, #tpu.memory_space<vmem>>, %arg5: memref<1x128xf32, #tpu.memory_space<vmem>>, %arg6: memref<128x128xbf16, #tpu.memory_space<vmem>>, %arg7: memref<1x128xf32, #tpu.memory_space<vmem>>, %arg8: memref<16x128xf32, #tpu.memory_space<vmem>>) attributes {dimension_semantics = [#tpu.dimension_semantics<parallel>], iteration_bounds = array<i64: 1>, scalar_prefetch = 0 : i64, scratch_operands = 0 : i64, tpu.core_type = #tpu.core_type<tc>, window_params = [{transform_indices = @transform_0, window_bounds = array<i64: 16, 128>}, {pipeline_mode = #tpu.pipeline_mode<synchronous>, transform_indices = @transform_1, window_bounds = array<i64: 128, 128>}, {pipeline_mode = #tpu.pipeline_mode<synchronous>, transform_indices = @transform_2, window_bounds = array<i64: 128, 128>}, {pipeline_mode = #tpu.pipeline_mode<synchronous>, transform_indices = @transform_3, window_bounds = array<i64: 1, 128>}, {pipeline_mode = #tpu.pipeline_mode<synchronous>, transform_indices = @transform_4, window_bounds = array<i64: 1, 128>}, {pipeline_mode = #tpu.pipeline_mode<synchronous>, transform_indices = @transform_5, window_bounds = array<i64: 128, 128>}, {pipeline_mode = #tpu.pipeline_mode<synchronous>, transform_indices = @transform_6, window_bounds = array<i64: 1, 128>}, {transform_indices = @transform_7, window_bounds = array<i64: 16, 128>}]} {
    %c0 = arith.constant 0 : index
    %c0_0 = arith.constant 0 : index
    %0 = vector.load %arg1[%c0, %c0_0] : memref<16x128xbf16, #tpu.memory_space<vmem>>, vector<16x128xbf16>
    %c0_1 = arith.constant 0 : index
    %c0_2 = arith.constant 0 : index
    %1 = vector.load %arg2[%c0_1, %c0_2] : memref<128x128xbf16, #tpu.memory_space<vmem>>, vector<128x128xbf16>
    %cst = arith.constant dense<0.000000e+00> : vector<16x128xf32>
    %2 = tpu.matmul %0, %1, %cst {dimension_numbers = #tpu.dot_dimension_numbers<[1], [0], [0], [1], [0, 0, 1, 1], [], []>} : vector<16x128xbf16>, vector<128x128xbf16>, vector<16x128xf32> -> vector<16x128xf32>
    %c0_3 = arith.constant 0 : index
    %c0_4 = arith.constant 0 : index
    %3 = vector.load %arg4[%c0_3, %c0_4] : memref<1x128xf32, #tpu.memory_space<vmem>>, vector<1x128xf32>
    %4 = vector.broadcast %3 : vector<1x128xf32> to vector<16x128xf32>
    %5 = arith.addf %2, %4 : vector<16x128xf32>
    %c0_5 = arith.constant 0 : index
    %c0_6 = arith.constant 0 : index
    %6 = vector.load %arg3[%c0_5, %c0_6] : memref<128x128xbf16, #tpu.memory_space<vmem>>, vector<128x128xbf16>
    %cst_7 = arith.constant dense<0.000000e+00> : vector<16x128xf32>
    %7 = tpu.matmul %0, %6, %cst_7 {dimension_numbers = #tpu.dot_dimension_numbers<[1], [0], [0], [1], [0, 0, 1, 1], [], []>} : vector<16x128xbf16>, vector<128x128xbf16>, vector<16x128xf32> -> vector<16x128xf32>
    %c0_8 = arith.constant 0 : index
    %c0_9 = arith.constant 0 : index
    %8 = vector.load %arg5[%c0_8, %c0_9] : memref<1x128xf32, #tpu.memory_space<vmem>>, vector<1x128xf32>
    %9 = vector.broadcast %8 : vector<1x128xf32> to vector<16x128xf32>
    %10 = arith.addf %7, %9 : vector<16x128xf32>
    %11 = arith.negf %5 : vector<16x128xf32>
    %12 = math.exp %11 : vector<16x128xf32>
    %cst_10 = arith.constant 1.000000e+00 : f32
    %13 = vector.broadcast %cst_10 : f32 to vector<16x128xf32>
    %14 = arith.addf %13, %12 : vector<16x128xf32>
    %15 = arith.divf %13, %14 : vector<16x128xf32>
    %16 = arith.mulf %15, %10 : vector<16x128xf32>
    %17 = arith.truncf %16 : vector<16x128xf32> to vector<16x128xbf16>
    %c0_11 = arith.constant 0 : index
    %c0_12 = arith.constant 0 : index
    %18 = vector.load %arg6[%c0_11, %c0_12] : memref<128x128xbf16, #tpu.memory_space<vmem>>, vector<128x128xbf16>
    %cst_13 = arith.constant dense<0.000000e+00> : vector<16x128xf32>
    %19 = tpu.matmul %17, %18, %cst_13 {dimension_numbers = #tpu.dot_dimension_numbers<[1], [0], [0], [1], [0, 0, 1, 1], [], []>} : vector<16x128xbf16>, vector<128x128xbf16>, vector<16x128xf32> -> vector<16x128xf32>
    %c0_14 = arith.constant 0 : index
    %c0_15 = arith.constant 0 : index
    %20 = vector.load %arg7[%c0_14, %c0_15] : memref<1x128xf32, #tpu.memory_space<vmem>>, vector<1x128xf32>
    %21 = vector.broadcast %20 : vector<1x128xf32> to vector<16x128xf32>
    %22 = arith.addf %19, %21 : vector<16x128xf32>
    %c0_16 = arith.constant 0 : index
    %c0_17 = arith.constant 0 : index
    %23 = vector.load %arg8[%c0_16, %c0_17] : memref<16x128xf32, #tpu.memory_space<vmem>>, vector<16x128xf32>
    tpu.vector_store %arg8[%c0_16, %c0_17], %22 {strides = array<i32>} : memref<16x128xf32, #tpu.memory_space<vmem>>, vector<16x128xf32>,
    return
  }
  func.func @transform_0(%arg0: i32) -> (i32, i32) {
    %c0_i32 = arith.constant 0 : i32
    %c0_i32_0 = arith.constant 0 : i32
    return %arg0, %c0_i32 : i32, i32
  }
  func.func @transform_1(%arg0: i32) -> (i32, i32) {
    %c0_i32 = arith.constant 0 : i32
    %c0_i32_0 = arith.constant 0 : i32
    %c0_i32_1 = arith.constant 0 : i32
    return %c0_i32, %c0_i32_0 : i32, i32
  }
  func.func @transform_2(%arg0: i32) -> (i32, i32) {
    %c0_i32 = arith.constant 0 : i32
    %c0_i32_0 = arith.constant 0 : i32
    %c0_i32_1 = arith.constant 0 : i32
    return %c0_i32, %c0_i32_0 : i32, i32
  }
  func.func @transform_3(%arg0: i32) -> (i32, i32) {
    %c0_i32 = arith.constant 0 : i32
    %c0_i32_0 = arith.constant 0 : i32
    %c0_i32_1 = arith.constant 0 : i32
    return %c0_i32, %c0_i32_0 : i32, i32
  }
  func.func @transform_4(%arg0: i32) -> (i32, i32) {
    %c0_i32 = arith.constant 0 : i32
    %c0_i32_0 = arith.constant 0 : i32
    %c0_i32_1 = arith.constant 0 : i32
    return %c0_i32, %c0_i32_0 : i32, i32
  }
  func.func @transform_5(%arg0: i32) -> (i32, i32) {
    %c0_i32 = arith.constant 0 : i32
    %c0_i32_0 = arith.constant 0 : i32
    %c0_i32_1 = arith.constant 0 : i32
    return %c0_i32, %c0_i32_0 : i32, i32
  }
  func.func @transform_6(%arg0: i32) -> (i32, i32) {
    %c0_i32 = arith.constant 0 : i32
    %c0_i32_0 = arith.constant 0 : i32
    %c0_i32_1 = arith.constant 0 : i32
    return %c0_i32, %c0_i32_0 : i32, i32
  }
  func.func @transform_7(%arg0: i32) -> (i32, i32) {
    %c0_i32 = arith.constant 0 : i32
    %c0_i32_0 = arith.constant 0 : i32
    return %arg0, %c0_i32 : i32, i32
  }
}

</mosaic_0001>

<llo_original>
// kernel: tpu_custom_call.1
$region0: #{tpu_custom_call.1}
  #allocation0 [shape = 'u32[]', space=smem, size = 0x4, offset = 0x4, fixed_abs, tag = 'smem constant byte address 0x4 - core index']
  #allocation1 [shape = 'u32[144,128]{1,0:T(1,128)}', space=vmem, size = 0x12000, scoped, tag = 'internal scratch']
  %s0 = inlined_call_operand.hbm [shape: bf16[16,128], index: 0, kind: input, shape index: {}]
  %s1 = inlined_call_operand.hbm [shape: bf16[128,128], index: 1, kind: input, shape index: {}]
  %s2 = inlined_call_operand.hbm [shape: bf16[128,128], index: 2, kind: input, shape index: {}]
  %s3 = inlined_call_operand.hbm [shape: f32[1,128], index: 3, kind: input, shape index: {}]
  %s4 = inlined_call_operand.hbm [shape: f32[1,128], index: 4, kind: input, shape index: {}]
  %s5 = inlined_call_operand.hbm [shape: bf16[128,128], index: 5, kind: input, shape index: {}]
  %s6 = inlined_call_operand.hbm [shape: f32[1,128], index: 6, kind: input, shape index: {}]
  %s7 = inlined_call_operand.hbm [shape: f32[16,128], index: 7, kind: output, shape index: {}]
  %s8 = sld [smem:[#allocation0]]
  $region66: #{tpu_custom_call.1} parent=0
    _
  %s10 = ssub.s32 1, %s8
  %s11 = scalar_select 0, %s10, %s8
  $region1: #{tpu_custom_call.1} parent=0
    #allocation2 [shape = 'u8[4096]{0}', space=vmem, size = 0x1000, scoped, tag = 'input window, operand 0, single buffered']
    #allocation3 [shape = 's32[1]{0}', space=sflag, size = 0x4, scoped, tag = 'scoped memory for tpu_custom_call.1']
    #allocation4 [shape = 's32[1]{0}', space=sflag, size = 0x4, scoped, tag = 'scoped memory for tpu_custom_call.1']
    #allocation5 [shape = 'u8[32768]{0}', space=vmem, size = 0x8000, scoped, tag = 'input window, operand 1, single buffered']
    #allocation6 [shape = 's32[1]{0}', space=sflag, size = 0x4, scoped, tag = 'scoped memory for tpu_custom_call.1']
    #allocation7 [shape = 'u8[32768]{0}', space=vmem, size = 0x8000, scoped, tag = 'input window, operand 2, single buffered']
    #allocation8 [shape = 'u8[512]{0}', space=vmem, size = 0x400, scoped, tag = 'input window, operand 3, single buffered']
    #allocation9 [shape = 's32[1]{0}', space=sflag, size = 0x4, scoped, tag = 'scoped memory for tpu_custom_call.1']
    #allocation10 [shape = 'u8[512]{0}', space=vmem, size = 0x400, scoped, tag = 'input window, operand 4, single buffered']
    #allocation11 [shape = 'u8[32768]{0}', space=vmem, size = 0x8000, scoped, tag = 'input window, operand 5, single buffered']
    #allocation12 [shape = 's32[1]{0}', space=sflag, size = 0x4, scoped, tag = 'scoped memory for tpu_custom_call.1']
    #allocation13 [shape = 'u8[512]{0}', space=vmem, size = 0x400, scoped, tag = 'input window, operand 6, single buffered']
    #allocation14 [shape = 'u8[8192]{0}', space=vmem, size = 0x2000, scoped, tag = 'output window, operand 0, single buffered']
    %12 = vsyncpa [#allocation3], 0
    %13 = vsyncpa [#allocation6], 0
    %14 = vsyncpa [#allocation9], 0
    %15 = vsyncpa [#allocation12], 0
    %16 = vsyncpa [#allocation4], 0
    // Predicated region
    $region2: #{tpu_custom_call.1} parent=1 // pred_check
      _
    $region3: #{tpu_custom_call.1} parent=1 // pred_check_branch
      %18 = sbr.rel (0) target = $region5
    $region4: #{tpu_custom_call.1} parent=1 // pred_region
      %s20 = ssub.s32 128, 128
      %21 = vsyncadd [#allocation3], %s20
      %s22 = sshll.u32 [#allocation2], 4
      %s23 = int_to_ptr.vmem [resolvable:$true] %s22
      %28 = dma.hbm_to_vmem [thread:$0]  %s0, 128, %s23, [#allocation3], 64, 64, 4
    $region5: #{tpu_custom_call.1} parent=1 // pred_fallthru
      _
    // Predicated region
    $region6: #{tpu_custom_call.1} parent=1 // pred_check
      _
    $region7: #{tpu_custom_call.1} parent=1 // pred_check_branch
      %30 = sbr.rel (0) target = $region9
    $region8: #{tpu_custom_call.1} parent=1 // pred_region
      %s32 = ssub.s32 1024, 1024
      %33 = vsyncadd [#allocation6], %s32
      %s34 = sshll.u32 [#allocation5], 4
      %s35 = int_to_ptr.vmem [resolvable:$true] %s34
      %40 = dma.hbm_to_vmem [thread:$0]  %s1, 1024, %s35, [#allocation6], 64, 64, 4
    $region9: #{tpu_custom_call.1} parent=1 // pred_fallthru
      _
    // Predicated region
    $region10: #{tpu_custom_call.1} parent=1 // pred_check
      _
    $region11: #{tpu_custom_call.1} parent=1 // pred_check_branch
      %42 = sbr.rel (0) target = $region13
    $region12: #{tpu_custom_call.1} parent=1 // pred_region
      %s44 = ssub.s32 1024, 1024
      %45 = vsyncadd [#allocation6], %s44
      %s46 = sshll.u32 [#allocation7], 4
      %s47 = int_to_ptr.vmem [resolvable:$true] %s46
      %52 = dma.hbm_to_vmem [thread:$0]  %s2, 1024, %s47, [#allocation6], 64, 64, 4
    $region13: #{tpu_custom_call.1} parent=1 // pred_fallthru
      _
    // Predicated region
    $region14: #{tpu_custom_call.1} parent=1 // pred_check
      _
    $region15: #{tpu_custom_call.1} parent=1 // pred_check_branch
      %54 = sbr.rel (0) target = $region17
    $region16: #{tpu_custom_call.1} parent=1 // pred_region
      %s56 = ssub.s32 16, 16
      %57 = vsyncadd [#allocation9], %s56
      %s59 = sshll.u32 [#allocation8], 4
      %s60 = int_to_ptr.vmem [resolvable:$true] %s59
      %62 = dma.hbm_to_vmem [thread:$0]  %s3, 16, %s60, [#allocation9]
    $region17: #{tpu_custom_call.1} parent=1 // pred_fallthru
      _
    // Predicated region
    $region18: #{tpu_custom_call.1} parent=1 // pred_check
      _
    $region19: #{tpu_custom_call.1} parent=1 // pred_check_branch
      %64 = sbr.rel (0) target = $region21
    $region20: #{tpu_custom_call.1} parent=1 // pred_region
      %s66 = ssub.s32 16, 16
      %67 = vsyncadd [#allocation9], %s66
      %s69 = sshll.u32 [#allocation10], 4
      %s70 = int_to_ptr.vmem [resolvable:$true] %s69
      %72 = dma.hbm_to_vmem [thread:$0]  %s4, 16, %s70, [#allocation9]
    $region21: #{tpu_custom_call.1} parent=1 // pred_fallthru
      _
    // Predicated region
    $region22: #{tpu_custom_call.1} parent=1 // pred_check
      _
    $region23: #{tpu_custom_call.1} parent=1 // pred_check_branch
      %74 = sbr.rel (0) target = $region25
    $region24: #{tpu_custom_call.1} parent=1 // pred_region
      %s76 = ssub.s32 1024, 1024
      %77 = vsyncadd [#allocation12], %s76
      %s78 = sshll.u32 [#allocation11], 4
      %s79 = int_to_ptr.vmem [resolvable:$true] %s78
      %84 = dma.hbm_to_vmem [thread:$0]  %s5, 1024, %s79, [#allocation12], 64, 64, 4
    $region25: #{tpu_custom_call.1} parent=1 // pred_fallthru
      _
    // Predicated region
    $region26: #{tpu_custom_call.1} parent=1 // pred_check
      _
    $region27: #{tpu_custom_call.1} parent=1 // pred_check_branch
      %86 = sbr.rel (0) target = $region29
    $region28: #{tpu_custom_call.1} parent=1 // pred_region
      %s88 = ssub.s32 16, 16
      %89 = vsyncadd [#allocation12], %s88
      %s91 = sshll.u32 [#allocation13], 4
      %s92 = int_to_ptr.vmem [resolvable:$true] %s91
      %94 = dma.hbm_to_vmem [thread:$0]  %s6, 16, %s92, [#allocation12]
    $region29: #{tpu_custom_call.1} parent=1 // pred_fallthru
      _
    // Predicated region
    $region30: #{tpu_custom_call.1} parent=1 // pred_check
      _
    $region31: #{tpu_custom_call.1} parent=1 // pred_check_branch
      %96 = sbr.rel (0) target = $region33
    $region32: #{tpu_custom_call.1} parent=1 // pred_region
      %97 = dma.done [#allocation3], 128
    $region33: #{tpu_custom_call.1} parent=1 // pred_fallthru
      _
    // Predicated region
    $region34: #{tpu_custom_call.1} parent=1 // pred_check
      _
    $region35: #{tpu_custom_call.1} parent=1 // pred_check_branch
      %99 = sbr.rel (0) target = $region37
    $region36: #{tpu_custom_call.1} parent=1 // pred_region
      %100 = dma.done [#allocation6], 1024
    $region37: #{tpu_custom_call.1} parent=1 // pred_fallthru
      _
    // Predicated region
    $region38: #{tpu_custom_call.1} parent=1 // pred_check
      _
    $region39: #{tpu_custom_call.1} parent=1 // pred_check_branch
      %102 = sbr.rel (0) target = $region41
    $region40: #{tpu_custom_call.1} parent=1 // pred_region
      %103 = dma.done [#allocation6], 1024
    $region41: #{tpu_custom_call.1} parent=1 // pred_fallthru
      _
    // Predicated region
    $region42: #{tpu_custom_call.1} parent=1 // pred_check
      _
    $region43: #{tpu_custom_call.1} parent=1 // pred_check_branch
      %105 = sbr.rel (0) target = $region45
    $region44: #{tpu_custom_call.1} parent=1 // pred_region
      %106 = dma.done [#allocation9], 16
    $region45: #{tpu_custom_call.1} parent=1 // pred_fallthru
      _
    // Predicated region
    $region46: #{tpu_custom_call.1} parent=1 // pred_check
      _
    $region47: #{tpu_custom_call.1} parent=1 // pred_check_branch
      %108 = sbr.rel (0) target = $region49
    $region48: #{tpu_custom_call.1} parent=1 // pred_region
      %109 = dma.done [#allocation9], 16
    $region49: #{tpu_custom_call.1} parent=1 // pred_fallthru
      _
    // Predicated region
    $region50: #{tpu_custom_call.1} parent=1 // pred_check
      _
    $region51: #{tpu_custom_call.1} parent=1 // pred_check_branch
      %111 = sbr.rel (0) target = $region53
    $region52: #{tpu_custom_call.1} parent=1 // pred_region
      %112 = dma.done [#allocation12], 1024
    $region53: #{tpu_custom_call.1} parent=1 // pred_fallthru
      _
    // Predicated region
    $region54: #{tpu_custom_call.1} parent=1 // pred_check
      _
    $region55: #{tpu_custom_call.1} parent=1 // pred_check_branch
      %114 = sbr.rel (0) target = $region57
    $region56: #{tpu_custom_call.1} parent=1 // pred_region
      %115 = dma.done [#allocation12], 16
    $region57: #{tpu_custom_call.1} parent=1 // pred_fallthru
      _
    %v117 = vld [vmem:[#allocation2] sm:$0xf]
    %v118 = vld [vmem:[#allocation2 + $0x4] sm:$0xf]
    %v119 = vld [vmem:[#allocation5] sm:$0xf]
    %v120 = vld [vmem:[#allocation5 + $0x4] sm:$0xf]
    %v121 = vld [vmem:[#allocation5 + $0x8] sm:$0xf]
    %v122 = vld [vmem:[#allocation5 + $0xc] sm:$0xf]
    %v123 = vld [vmem:[#allocation5 + $0x10] sm:$0xf]
    %v124 = vld [vmem:[#allocation5 + $0x14] sm:$0xf]
    %v125 = vld [vmem:[#allocation5 + $0x18] sm:$0xf]
    %v126 = vld [vmem:[#allocation5 + $0x1c] sm:$0xf]
    %v127 = vld [vmem:[#allocation5 + $0x20] sm:$0xf]
    %v128 = vld [vmem:[#allocation5 + $0x24] sm:$0xf]
    %v129 = vld [vmem:[#allocation5 + $0x28] sm:$0xf]
    %v130 = vld [vmem:[#allocation5 + $0x2c] sm:$0xf]
    %v131 = vld [vmem:[#allocation5 + $0x30] sm:$0xf]
    %v132 = vld [vmem:[#allocation5 + $0x34] sm:$0xf]
    %v133 = vld [vmem:[#allocation5 + $0x38] sm:$0xf]
    %v134 = vld [vmem:[#allocation5 + $0x3c] sm:$0xf]
    %v135 = vld [vmem:[#allocation8] sm:$0x1]
    %v137 = vlaneseq
    %v138 = vshrl.u32 %v137, 7
    %v139 = vsub.s32 0, %v138
    %v140 = vrot.slane %v135, %v139
    %v144 = vunpack.c.l.b16 %v117
    %v145 = vunpack.c.l.b16 %v118
    %v146 = vpack.c.b16 %v145, %v144
    %v164 = vunpack.c.l.b16 %v119
    %v165 = vunpack.c.l.b16 %v120
    %v166 = vunpack.c.l.b16 %v121
    %v167 = vunpack.c.l.b16 %v122
    %v168 = vunpack.c.l.b16 %v123
    %v169 = vunpack.c.l.b16 %v124
    %v170 = vunpack.c.l.b16 %v125
    %v171 = vunpack.c.l.b16 %v126
    %v172 = vunpack.c.l.b16 %v127
    %v173 = vunpack.c.l.b16 %v128
    %v174 = vunpack.c.l.b16 %v129
    %v175 = vunpack.c.l.b16 %v130
    %v176 = vunpack.c.l.b16 %v131
    %v177 = vunpack.c.l.b16 %v132
    %v178 = vunpack.c.l.b16 %v133
    %v179 = vunpack.c.l.b16 %v134
    %v180 = vpack.c.b16 %v165, %v164
    %v181 = vpack.c.b16 %v167, %v166
    %v182 = vpack.c.b16 %v169, %v168
    %v183 = vpack.c.b16 %v171, %v170
    %v184 = vpack.c.b16 %v173, %v172
    %v185 = vpack.c.b16 %v175, %v174
    %v186 = vpack.c.b16 %v177, %v176
    %v187 = vpack.c.b16 %v179, %v178
    %196 = vmatprep.subr.bf16.mxu0 0
    %197 = vmatpush1.bf16.msra.mxu0 %v180
    %198 = vmatprep.subr.bf16.mxu0 0
    %199 = vmatpush1.bf16.msra.mxu0 %v181
    %200 = vmatprep.subr.bf16.mxu0 0
    %201 = vmatpush1.bf16.msra.mxu0 %v182
    %202 = vmatprep.subr.bf16.mxu0 0
    %203 = vmatpush1.bf16.msra.mxu0 %v183
    %204 = vmatprep.subr.bf16.mxu0 0
    %205 = vmatpush1.bf16.msra.mxu0 %v184
    %206 = vmatprep.subr.bf16.mxu0 0
    %207 = vmatpush1.bf16.msra.mxu0 %v185
    %208 = vmatprep.subr.bf16.mxu0 0
    %209 = vmatpush1.bf16.msra.mxu0 %v186
    %210 = vmatprep.subr.bf16.mxu0 0
    %211 = vmatpush1.bf16.msra.mxu0 %v187
    %212 = vmatprep.subr.bf16.mxu0 0
    %213 = vmatpush1.bf16.msra.mxu0 0
    %214 = vmatprep.subr.bf16.mxu0 0
    %215 = vmatpush1.bf16.msra.mxu0 0
    %216 = vmatprep.subr.bf16.mxu0 0
    %217 = vmatpush1.bf16.msra.mxu0 0
    %218 = vmatprep.subr.bf16.mxu0 0
    %219 = vmatpush1.bf16.msra.mxu0 0
    %220 = vmatprep.subr.bf16.mxu0 0
    %221 = vmatpush1.bf16.msra.mxu0 0
    %222 = vmatprep.subr.bf16.mxu0 0
    %223 = vmatpush1.bf16.msra.mxu0 0
    %224 = vmatprep.subr.bf16.mxu0 0
    %225 = vmatpush1.bf16.msra.mxu0 0
    %226 = vmatprep.subr.bf16.mxu0 0
    %227 = vmatpush1.bf16.msra.mxu0 0
    %228 = vmatprep.mubr.bf16.mxu0 0
    %229 = vmatmul.mubr.bf16.gmra.mrb[0].mxu0 %v146
    %v230 = vpop.f32.mrb[0].mxu0
    %v231 = vadd.f32 %v140, %v230
    %v232 = vpop.f32.mrb[0].mxu0
    %v233 = vpop.f32.mrb[0].mxu0
    %v234 = vadd.f32 %v140, %v233
    %v235 = vpop.f32.mrb[0].mxu0
    %236 = vdwg.mxu0
    %v237 = vld [vmem:[#allocation7] sm:$0xf]
    %v238 = vld [vmem:[#allocation7 + $0x4] sm:$0xf]
    %v239 = vld [vmem:[#allocation7 + $0x8] sm:$0xf]
    %v240 = vld [vmem:[#allocation7 + $0xc] sm:$0xf]
    %v241 = vld [vmem:[#allocation7 + $0x10] sm:$0xf]
    %v242 = vld [vmem:[#allocation7 + $0x14] sm:$0xf]
    %v243 = vld [vmem:[#allocation7 + $0x18] sm:$0xf]
    %v244 = vld [vmem:[#allocation7 + $0x1c] sm:$0xf]
    %v245 = vld [vmem:[#allocation7 + $0x20] sm:$0xf]
    %v246 = vld [vmem:[#allocation7 + $0x24] sm:$0xf]
    %v247 = vld [vmem:[#allocation7 + $0x28] sm:$0xf]
    %v248 = vld [vmem:[#allocation7 + $0x2c] sm:$0xf]
    %v249 = vld [vmem:[#allocation7 + $0x30] sm:$0xf]
    %v250 = vld [vmem:[#allocation7 + $0x34] sm:$0xf]
    %v251 = vld [vmem:[#allocation7 + $0x38] sm:$0xf]
    %v252 = vld [vmem:[#allocation7 + $0x3c] sm:$0xf]
    %v253 = vld [vmem:[#allocation10] sm:$0x1]
    %v255 = vlaneseq
    %v256 = vshrl.u32 %v255, 7
    %v257 = vsub.s32 0, %v256
    %v258 = vrot.slane %v253, %v257
    %v276 = vunpack.c.l.b16 %v237
    %v277 = vunpack.c.l.b16 %v238
    %v278 = vunpack.c.l.b16 %v239
    %v279 = vunpack.c.l.b16 %v240
    %v280 = vunpack.c.l.b16 %v241
    %v281 = vunpack.c.l.b16 %v242
    %v282 = vunpack.c.l.b16 %v243
    %v283 = vunpack.c.l.b16 %v244
    %v284 = vunpack.c.l.b16 %v245
    %v285 = vunpack.c.l.b16 %v246
    %v286 = vunpack.c.l.b16 %v247
    %v287 = vunpack.c.l.b16 %v248
    %v288 = vunpack.c.l.b16 %v249
    %v289 = vunpack.c.l.b16 %v250
    %v290 = vunpack.c.l.b16 %v251
    %v291 = vunpack.c.l.b16 %v252
    %v292 = vpack.c.b16 %v277, %v276
    %v293 = vpack.c.b16 %v279, %v278
    %v294 = vpack.c.b16 %v281, %v280
    %v295 = vpack.c.b16 %v283, %v282
    %v296 = vpack.c.b16 %v285, %v284
    %v297 = vpack.c.b16 %v287, %v286
    %v298 = vpack.c.b16 %v289, %v288
    %v299 = vpack.c.b16 %v291, %v290
    %308 = vmatprep.subr.bf16.mxu0 0
    %309 = vmatpush1.bf16.msra.mxu0 %v292
    %310 = vmatprep.subr.bf16.mxu0 0
    %311 = vmatpush1.bf16.msra.mxu0 %v293
    %312 = vmatprep.subr.bf16.mxu0 0
    %313 = vmatpush1.bf16.msra.mxu0 %v294
    %314 = vmatprep.subr.bf16.mxu0 0
    %315 = vmatpush1.bf16.msra.mxu0 %v295
    %316 = vmatprep.subr.bf16.mxu0 0
    %317 = vmatpush1.bf16.msra.mxu0 %v296
    %318 = vmatprep.subr.bf16.mxu0 0
    %319 = vmatpush1.bf16.msra.mxu0 %v297
    %320 = vmatprep.subr.bf16.mxu0 0
    %321 = vmatpush1.bf16.msra.mxu0 %v298
    %322 = vmatprep.subr.bf16.mxu0 0
    %323 = vmatpush1.bf16.msra.mxu0 %v299
    %324 = vmatprep.subr.bf16.mxu0 0
    %325 = vmatpush1.bf16.msra.mxu0 0
    %326 = vmatprep.subr.bf16.mxu0 0
    %327 = vmatpush1.bf16.msra.mxu0 0
    %328 = vmatprep.subr.bf16.mxu0 0
    %329 = vmatpush1.bf16.msra.mxu0 0
    %330 = vmatprep.subr.bf16.mxu0 0
    %331 = vmatpush1.bf16.msra.mxu0 0
    %332 = vmatprep.subr.bf16.mxu0 0
    %333 = vmatpush1.bf16.msra.mxu0 0
    %334 = vmatprep.subr.bf16.mxu0 0
    %335 = vmatpush1.bf16.msra.mxu0 0
    %336 = vmatprep.subr.bf16.mxu0 0
    %337 = vmatpush1.bf16.msra.mxu0 0
    %338 = vmatprep.subr.bf16.mxu0 0
    %339 = vmatpush1.bf16.msra.mxu0 0
    %340 = vmatprep.mubr.bf16.mxu0 0
    %341 = vmatmul.mubr.bf16.gmra.mrb[0].mxu0 %v146
    %v342 = vpop.f32.mrb[0].mxu0
    %v343 = vadd.f32 %v258, %v342
    %v344 = vpop.f32.mrb[0].mxu0
    %v345 = vpop.f32.mrb[0].mxu0
    %v346 = vadd.f32 %v258, %v345
    %v347 = vpop.f32.mrb[0].mxu0
    %348 = vdwg.mxu0
    %v349 = vxor.u32 %v231, 2147483648
    %v350 = vxor.u32 %v234, 2147483648
    %v351 = vmul.f32 %v349, 1.442695
    %v352 = vpow.pop %v351
    %v353 = vmul.f32 %v350, 1.442695
    %v354 = vpow.pop %v353
    %v355 = vadd.f32 %v352, 1.0
    %v356 = vadd.f32 %v354, 1.0
    %v357 = vrcp.pop %v355
    %v358 = vmul.f32 1.0, %v357
    %v359 = vrcp.pop %v356
    %v360 = vmul.f32 1.0, %v359
    %v361 = vmul.f32 %v358, %v343
    %v362 = vmul.f32 %v360, %v346
    %v363 = vpack.c.bf16 %v362, %v361
    %v364 = vld [vmem:[#allocation11] sm:$0xf]
    %v365 = vld [vmem:[#allocation11 + $0x4] sm:$0xf]
    %v366 = vld [vmem:[#allocation11 + $0x8] sm:$0xf]
    %v367 = vld [vmem:[#allocation11 + $0xc] sm:$0xf]
    %v368 = vld [vmem:[#allocation11 + $0x10] sm:$0xf]
    %v369 = vld [vmem:[#allocation11 + $0x14] sm:$0xf]
    %v370 = vld [vmem:[#allocation11 + $0x18] sm:$0xf]
    %v371 = vld [vmem:[#allocation11 + $0x1c] sm:$0xf]
    %v372 = vld [vmem:[#allocation11 + $0x20] sm:$0xf]
    %v373 = vld [vmem:[#allocation11 + $0x24] sm:$0xf]
    %v374 = vld [vmem:[#allocation11 + $0x28] sm:$0xf]
    %v375 = vld [vmem:[#allocation11 + $0x2c] sm:$0xf]
    %v376 = vld [vmem:[#allocation11 + $0x30] sm:$0xf]
    %v377 = vld [vmem:[#allocation11 + $0x34] sm:$0xf]
    %v378 = vld [vmem:[#allocation11 + $0x38] sm:$0xf]
    %v379 = vld [vmem:[#allocation11 + $0x3c] sm:$0xf]
    %v380 = vld [vmem:[#allocation13] sm:$0x1]
    %v382 = vlaneseq
    %v383 = vshrl.u32 %v382, 7
    %v384 = vsub.s32 0, %v383
    %v385 = vrot.slane %v380, %v384
    %v403 = vunpack.c.l.b16 %v364
    %v404 = vunpack.c.l.b16 %v365
    %v405 = vunpack.c.l.b16 %v366
    %v406 = vunpack.c.l.b16 %v367
    %v407 = vunpack.c.l.b16 %v368
    %v408 = vunpack.c.l.b16 %v369
    %v409 = vunpack.c.l.b16 %v370
    %v410 = vunpack.c.l.b16 %v371
    %v411 = vunpack.c.l.b16 %v372
    %v412 = vunpack.c.l.b16 %v373
    %v413 = vunpack.c.l.b16 %v374
    %v414 = vunpack.c.l.b16 %v375
    %v415 = vunpack.c.l.b16 %v376
    %v416 = vunpack.c.l.b16 %v377
    %v417 = vunpack.c.l.b16 %v378
    %v418 = vunpack.c.l.b16 %v379
    %v419 = vpack.c.b16 %v404, %v403
    %v420 = vpack.c.b16 %v406, %v405
    %v421 = vpack.c.b16 %v408, %v407
    %v422 = vpack.c.b16 %v410, %v409
    %v423 = vpack.c.b16 %v412, %v411
    %v424 = vpack.c.b16 %v414, %v413
    %v425 = vpack.c.b16 %v416, %v415
    %v426 = vpack.c.b16 %v418, %v417
    %435 = vmatprep.subr.bf16.mxu0 0
    %436 = vmatpush1.bf16.msra.mxu0 %v419
    %437 = vmatprep.subr.bf16.mxu0 0
    %438 = vmatpush1.bf16.msra.mxu0 %v420
    %439 = vmatprep.subr.bf16.mxu0 0
    %440 = vmatpush1.bf16.msra.mxu0 %v421
    %441 = vmatprep.subr.bf16.mxu0 0
    %442 = vmatpush1.bf16.msra.mxu0 %v422
    %443 = vmatprep.subr.bf16.mxu0 0
    %444 = vmatpush1.bf16.msra.mxu0 %v423
    %445 = vmatprep.subr.bf16.mxu0 0
    %446 = vmatpush1.bf16.msra.mxu0 %v424
    %447 = vmatprep.subr.bf16.mxu0 0
    %448 = vmatpush1.bf16.msra.mxu0 %v425
    %449 = vmatprep.subr.bf16.mxu0 0
    %450 = vmatpush1.bf16.msra.mxu0 %v426
    %451 = vmatprep.subr.bf16.mxu0 0
    %452 = vmatpush1.bf16.msra.mxu0 0
    %453 = vmatprep.subr.bf16.mxu0 0
    %454 = vmatpush1.bf16.msra.mxu0 0
    %455 = vmatprep.subr.bf16.mxu0 0
    %456 = vmatpush1.bf16.msra.mxu0 0
    %457 = vmatprep.subr.bf16.mxu0 0
    %458 = vmatpush1.bf16.msra.mxu0 0
    %459 = vmatprep.subr.bf16.mxu0 0
    %460 = vmatpush1.bf16.msra.mxu0 0
    %461 = vmatprep.subr.bf16.mxu0 0
    %462 = vmatpush1.bf16.msra.mxu0 0
    %463 = vmatprep.subr.bf16.mxu0 0
    %464 = vmatpush1.bf16.msra.mxu0 0
    %465 = vmatprep.subr.bf16.mxu0 0
    %466 = vmatpush1.bf16.msra.mxu0 0
    %467 = vmatprep.mubr.bf16.mxu0 0
    %468 = vmatmul.mubr.bf16.gmra.mrb[0].mxu0 %v363
    %v469 = vpop.f32.mrb[0].mxu0
    %v470 = vadd.f32 %v385, %v469
    %v471 = vpop.f32.mrb[0].mxu0
    %v472 = vpop.f32.mrb[0].mxu0
    %v473 = vadd.f32 %v385, %v472
    %v474 = vpop.f32.mrb[0].mxu0
    %475 = vdwg.mxu0
    %476 = vst [vmem:[#allocation14] sm:$0xff] %v470
    %477 = vst [vmem:[#allocation14 + $0x8] sm:$0xff] %v473
    // Predicated region
    $region58: #{tpu_custom_call.1} parent=1 // pred_check
      _
    $region59: #{tpu_custom_call.1} parent=1 // pred_check_branch
      %479 = sbr.rel (0) target = $region61
    $region60: #{tpu_custom_call.1} parent=1 // pred_region
      %s481 = ssub.s32 256, 256
      %482 = vsyncadd [#allocation4], %s481
      %s483 = sshll.u32 [#allocation14], 4
      %s484 = int_to_ptr.vmem [resolvable:$true] %s483
      %489 = dma.vmem_to_hbm [thread:$0]  %s484, 256, %s7, [#allocation4], 128, 128, 8
    $region61: #{tpu_custom_call.1} parent=1 // pred_fallthru
      _
    // Predicated region
    $region62: #{tpu_custom_call.1} parent=1 // pred_check
      _
    $region63: #{tpu_custom_call.1} parent=1 // pred_check_branch
      %491 = sbr.rel (0) target = $region65
    $region64: #{tpu_custom_call.1} parent=1 // pred_region
      %492 = dma.done [#allocation4], 256
    $region65: #{tpu_custom_call.1} parent=1 // pred_fallthru
      _
    %493 = vsyncpa [#allocation3], 1
    %494 = vsyncpa [#allocation6], 1
    %495 = vsyncpa [#allocation9], 1
    %496 = vsyncpa [#allocation12], 1
    %497 = vsyncpa [#allocation4], 1

</llo_original>
